<compile_context>
chip_gen: v7x
topology: tpu7x:2x2x1
jax: 0.10.0
libtpu: 0.0.40
codegen_flags: <defaults>
</compile_context>

<pallas_src>
import jax
import jax.numpy as jnp
from jax.experimental import pallas as pl
from jax.experimental.pallas import tpu as pltpu

N_MODELS = 5  # n_models_global in the PyTorch source


def _podnn_fc_kernel(x_ref, w_ref, b_ref, o_ref):
    # x_ref: (n_samples, M*in_dim)   lane-dense activations
    # w_ref: (M*in_dim, M*out_dim)   block-diagonal, K-major weights
    # b_ref: (1, M*out_dim)          flattened per-model biases
    # o_ref: (n_samples, M*out_dim)  lane-dense output
    y = jnp.dot(x_ref[...], w_ref[...], preferred_element_type=jnp.float32)
    y = y + b_ref[...]
    o_ref[...] = jnp.maximum(y, 0.0).astype(o_ref.dtype)


def _prep_params(weights, biases):
    """One-time parameter layout prep (do at parameter-load time in a model).

    weights: (M, out_dim, in_dim) native nn.Linear layout
    biases:  (M, out_dim)
    returns: block-diagonal K-major weight (M*in_dim, M*out_dim) and
             flattened bias (1, M*out_dim).
    """
    n_models, out_dim, in_dim = weights.shape
    w_t = jnp.transpose(weights, (0, 2, 1))            # (M, in_dim, out_dim), K-major
    eye = jnp.eye(n_models, dtype=weights.dtype)       # (M, M)
    # w_bd[m*in+d, n*out+h] = delta(m,n) * W_n[h,d]
    w_bd = jnp.einsum("mn,mdh->mdnh", eye, w_t).reshape(
        n_models * in_dim, n_models * out_dim)
    b_flat = biases.reshape(1, n_models * out_dim)
    return w_bd, b_flat


@jax.jit
def parallel_layer_forward(x, weights, biases):
    """
    x:       (n_models, n_samples, in_dim)
    weights: (n_models, out_dim, in_dim)   -- native PyTorch nn.Linear layout
    biases:  (n_models, out_dim)
    returns: (n_models, n_samples, out_dim)
    """
    n_models, n_samples, in_dim = x.shape
    out_dim = weights.shape[1]

    w_bd, b_flat = _prep_params(weights, biases)

    # Fold the model axis into the lane dimension (layout plumbing, wrapper-side).
    x_flat = jnp.transpose(x, (1, 0, 2)).reshape(n_samples, n_models * in_dim)

    out_flat = pl.pallas_call(
        _podnn_fc_kernel,
        out_shape=jax.ShapeDtypeStruct((n_samples, n_models * out_dim), x.dtype),
        # Single gridless invocation: whole arrays resident in VMEM, no pipeline.
        in_specs=[
            pl.BlockSpec(memory_space=pltpu.MemorySpace.VMEM),
            pl.BlockSpec(memory_space=pltpu.MemorySpace.VMEM),
            pl.BlockSpec(memory_space=pltpu.MemorySpace.VMEM),
        ],
        out_specs=pl.BlockSpec(memory_space=pltpu.MemorySpace.VMEM),
    )(x_flat, w_bd, b_flat)

    # Unfold the lane-dense slab back to the PyTorch output layout.
    return jnp.transpose(out_flat.reshape(n_samples, n_models, out_dim),
                         (1, 0, 2))


def _reference(x, weights, biases):
    # Pure-JAX reference mirroring the PyTorch loop: out[i] = relu(x[i] @ W_i.T + b_i)
    y = jnp.einsum("mnd,mhd->mnh", x, weights) + biases[:, None, :]
    return jnp.maximum(y, 0.0)


if __name__ == "__main__":
    key = jax.random.PRNGKey(0)
    n_samples, in_dim, out_dim = 8, 32, 32

    kx, kw, kb = jax.random.split(key, 3)
    x = jax.random.normal(kx, (N_MODELS, n_samples, in_dim), dtype=jnp.float32)
    # Each parallel unit has its own independently-initialized Linear
    # (reset_parameters() + deepcopy in the PyTorch source).
    weights = jax.random.normal(kw, (N_MODELS, out_dim, in_dim),
                                dtype=jnp.float32) * 0.1
    biases = jax.random.normal(kb, (N_MODELS, out_dim), dtype=jnp.float32) * 0.1

    out = parallel_layer_forward(x, weights, biases)
    out = jax.block_until_ready(out)

    ref = _reference(x, weights, biases)
    assert out.shape == (N_MODELS, n_samples, out_dim)
    assert jnp.allclose(out, ref, atol=1e-5, rtol=1e-5), "mismatch vs reference"

    print("KERNEL_OK")
</pallas_src>

<mosaic_0001>
module attributes {stable_mosaic.version = 11 : i64} {
  func.func @_podnn_fc_kernel(%arg0: memref<8x160xf32, #tpu.memory_space<vmem>>, %arg1: memref<160x160xf32, #tpu.memory_space<vmem>>, %arg2: memref<1x160xf32, #tpu.memory_space<vmem>>, %arg3: memref<8x160xf32, #tpu.memory_space<vmem>>) attributes {dimension_semantics = [], scalar_prefetch = 0 : i64, scratch_operands = 0 : i64, tpu.core_type = #tpu.core_type<tc>} {
    %c0 = arith.constant 0 : index
    %c0_0 = arith.constant 0 : index
    %0 = vector.load %arg0[%c0, %c0_0] : memref<8x160xf32, #tpu.memory_space<vmem>>, vector<8x160xf32>
    %c0_1 = arith.constant 0 : index
    %c0_2 = arith.constant 0 : index
    %1 = vector.load %arg1[%c0_1, %c0_2] : memref<160x160xf32, #tpu.memory_space<vmem>>, vector<160x160xf32>
    %cst = arith.constant dense<0.000000e+00> : vector<8x160xf32>
    %2 = tpu.matmul %0, %1, %cst {dimension_numbers = #tpu.dot_dimension_numbers<[1], [0], [0], [1], [0, 0, 1, 1], [], []>} : vector<8x160xf32>, vector<160x160xf32>, vector<8x160xf32> -> vector<8x160xf32>
    %c0_3 = arith.constant 0 : index
    %c0_4 = arith.constant 0 : index
    %3 = vector.load %arg2[%c0_3, %c0_4] : memref<1x160xf32, #tpu.memory_space<vmem>>, vector<1x160xf32>
    %4 = vector.broadcast %3 : vector<1x160xf32> to vector<8x160xf32>
    %5 = arith.addf %2, %4 : vector<8x160xf32>
    %cst_5 = arith.constant 0.000000e+00 : f32
    %6 = vector.broadcast %cst_5 : f32 to vector<8x160xf32>
    %7 = arith.maximumf %5, %6 : vector<8x160xf32>
    %c0_6 = arith.constant 0 : index
    %c0_7 = arith.constant 0 : index
    %8 = vector.load %arg3[%c0_6, %c0_7] : memref<8x160xf32, #tpu.memory_space<vmem>>, vector<8x160xf32>
    tpu.vector_store %arg3[%c0_6, %c0_7], %7 {strides = array<i32>} : memref<8x160xf32, #tpu.memory_space<vmem>>, vector<8x160xf32>,
    return
  }
}

</mosaic_0001>

<llo_original>
// kernel: parallel_layer_forward.1
$region0: #{parallel_layer_forward.1}
  #allocation0 [shape = 'u32[]', space=smem, size = 0x4, offset = 0x4, fixed_abs, tag = 'smem constant byte address 0x4 - core index']
  #allocation1 [shape = 'u32[144,128]{1,0:T(1,128)}', space=vmem, size = 0x12000, scoped, tag = 'internal scratch']
  %s0 = inlined_call_operand.vmem [shape: f32[8,160], index: 0, kind: input, shape index: {}]
  %s1 = inlined_call_operand.vmem [shape: f32[160,160], index: 1, kind: input, shape index: {}]
  %s2 = inlined_call_operand.vmem [shape: f32[1,160], index: 2, kind: input, shape index: {}]
  %s3 = inlined_call_operand.vmem [shape: f32[8,160], index: 3, kind: output, shape index: {}]
  %s4 = sld [smem:[#allocation0]]
  $region22: #{parallel_layer_forward.1} parent=0
    _
  %s6 = ssub.s32 1, %s4
  %s7 = scalar_select 0, %s6, %s4
  // Predicated region
  $region2: #{parallel_layer_forward.1} parent=0 // pred_check
    _
  $region3: #{parallel_layer_forward.1} parent=0 // pred_check_branch
    %9 = sbr.rel (0) target = $region5
  $region4: #{parallel_layer_forward.1} parent=0 // pred_region
    _
  $region5: #{parallel_layer_forward.1} parent=0 // pred_fallthru
    _
  // Predicated region
  $region6: #{parallel_layer_forward.1} parent=0 // pred_check
    _
  $region7: #{parallel_layer_forward.1} parent=0 // pred_check_branch
    %11 = sbr.rel (0) target = $region9
  $region8: #{parallel_layer_forward.1} parent=0 // pred_region
    _
  $region9: #{parallel_layer_forward.1} parent=0 // pred_fallthru
    _
  // Predicated region
  $region10: #{parallel_layer_forward.1} parent=0 // pred_check
    _
  $region11: #{parallel_layer_forward.1} parent=0 // pred_check_branch
    %13 = sbr.rel (0) target = $region13
  $region12: #{parallel_layer_forward.1} parent=0 // pred_region
    _
  $region13: #{parallel_layer_forward.1} parent=0 // pred_fallthru
    _
  %v14 = vld [vmem:[%s0] sm:$0xff]
  %v15 = vld [vmem:[%s0 + $0x8] sm:$0xff]
  %v16 = vld [vmem:[%s1] sm:$0xff]
  %v17 = vld [vmem:[%s1 + $0x8] sm:$0xff]
  %v18 = vld [vmem:[%s1 + $0x10] sm:$0xff]
  %v19 = vld [vmem:[%s1 + $0x18] sm:$0xff]
  %v20 = vld [vmem:[%s1 + $0x20] sm:$0xff]
  %v21 = vld [vmem:[%s1 + $0x28] sm:$0xff]
  %v22 = vld [vmem:[%s1 + $0x30] sm:$0xff]
  %v23 = vld [vmem:[%s1 + $0x38] sm:$0xff]
  %v24 = vld [vmem:[%s1 + $0x40] sm:$0xff]
  %v25 = vld [vmem:[%s1 + $0x48] sm:$0xff]
  %v26 = vld [vmem:[%s1 + $0x50] sm:$0xff]
  %v27 = vld [vmem:[%s1 + $0x58] sm:$0xff]
  %v28 = vld [vmem:[%s1 + $0x60] sm:$0xff]
  %v29 = vld [vmem:[%s1 + $0x68] sm:$0xff]
  %v30 = vld [vmem:[%s1 + $0x70] sm:$0xff]
  %v31 = vld [vmem:[%s1 + $0x78] sm:$0xff]
  %v32 = vld [vmem:[%s1 + $0x80] sm:$0xff]
  %v33 = vld [vmem:[%s1 + $0x88] sm:$0xff]
  %v34 = vld [vmem:[%s1 + $0x90] sm:$0xff]
  %v35 = vld [vmem:[%s1 + $0x98] sm:$0xff]
  %v36 = vld [vmem:[%s1 + $0xa0] sm:$0xff]
  %v37 = vld [vmem:[%s1 + $0xa8] sm:$0xff]
  %v38 = vld [vmem:[%s1 + $0xb0] sm:$0xff]
  %v39 = vld [vmem:[%s1 + $0xb8] sm:$0xff]
  %v40 = vld [vmem:[%s1 + $0xc0] sm:$0xff]
  %v41 = vld [vmem:[%s1 + $0xc8] sm:$0xff]
  %v42 = vld [vmem:[%s1 + $0xd0] sm:$0xff]
  %v43 = vld [vmem:[%s1 + $0xd8] sm:$0xff]
  %v44 = vld [vmem:[%s1 + $0xe0] sm:$0xff]
  %v45 = vld [vmem:[%s1 + $0xe8] sm:$0xff]
  %v46 = vld [vmem:[%s1 + $0xf0] sm:$0xff]
  %v47 = vld [vmem:[%s1 + $0xf8] sm:$0xff]
  %v48 = vld [vmem:[%s1 + $0x100] sm:$0xff]
  %v49 = vld [vmem:[%s1 + $0x108] sm:$0xff]
  %v50 = vld [vmem:[%s1 + $0x110] sm:$0xff]
  %v51 = vld [vmem:[%s1 + $0x118] sm:$0xff]
  %v52 = vld [vmem:[%s1 + $0x120] sm:$0xff]
  %v53 = vld [vmem:[%s1 + $0x128] sm:$0xff]
  %v54 = vld [vmem:[%s1 + $0x130] sm:$0xff]
  %v55 = vld [vmem:[%s1 + $0x138] sm:$0xff]
  %v56 = vld [vmem:[%s2] sm:$0x3]
  %v58 = vlaneseq
  %v59 = vshrl.u32 %v58, 7
  %v60 = vsub.s32 0, %v59
  %v61 = vrot.slane %v56, %v60
  %v62 = vlaneseq
  %v63 = vshrl.u32 %v62, 7
  %v64 = vsub.s32 1, %v63
  %v65 = vrot.slane %v56, %v64
  %vm68 = vcmask 261120
  %v70 = vsel %vm68, %v15, 0
  %72 = vmatprep.subr.mxu0 %v17
  %73 = vmatpush1.msra.mxu0 %v16
  %74 = vmatprep.subr.mxu0 %v19
  %75 = vmatpush1.msra.mxu0 %v18
  %76 = vmatprep.subr.mxu0 %v21
  %77 = vmatpush1.msra.mxu0 %v20
  %78 = vmatprep.subr.mxu0 %v23
  %79 = vmatpush1.msra.mxu0 %v22
  %80 = vmatprep.subr.mxu0 %v25
  %81 = vmatpush1.msra.mxu0 %v24
  %82 = vmatprep.subr.mxu0 %v27
  %83 = vmatpush1.msra.mxu0 %v26
  %84 = vmatprep.subr.mxu0 %v29
  %85 = vmatpush1.msra.mxu0 %v28
  %86 = vmatprep.subr.mxu0 %v31
  %87 = vmatpush1.msra.mxu0 %v30
  %88 = vmatprep.subr.mxu0 %v33
  %89 = vmatpush1.msra.mxu0 %v32
  %90 = vmatprep.subr.mxu0 %v35
  %91 = vmatpush1.msra.mxu0 %v34
  %92 = vmatprep.subr.mxu0 %v37
  %93 = vmatpush1.msra.mxu0 %v36
  %94 = vmatprep.subr.mxu0 %v39
  %95 = vmatpush1.msra.mxu0 %v38
  %96 = vmatprep.subr.mxu0 %v41
  %97 = vmatpush1.msra.mxu0 %v40
  %98 = vmatprep.subr.mxu0 %v43
  %99 = vmatpush1.msra.mxu0 %v42
  %100 = vmatprep.subr.mxu0 %v45
  %101 = vmatpush1.msra.mxu0 %v44
  %102 = vmatprep.subr.mxu0 %v47
  %103 = vmatpush1.msra.mxu0 %v46
  %104 = vmatprep.subr.mxu0 %v49
  %105 = vmatpush1.msra.mxu0 %v48
  %106 = vmatprep.subr.mxu0 %v51
  %107 = vmatpush1.msra.mxu0 %v50
  %108 = vmatprep.subr.mxu0 %v53
  %109 = vmatpush1.msra.mxu0 %v52
  %110 = vmatprep.subr.mxu0 %v55
  %111 = vmatpush1.msra.mxu0 %v54
  %112 = vmatprep.subr.mxu0 0.0
  %113 = vmatpush1.msra.mxu0 0.0
  %114 = vmatprep.subr.mxu0 0.0
  %115 = vmatpush1.msra.mxu0 0.0
  %116 = vmatprep.subr.mxu0 0.0
  %117 = vmatpush1.msra.mxu0 0.0
  %118 = vmatprep.subr.mxu0 0.0
  %119 = vmatpush1.msra.mxu0 0.0
  %120 = vmatprep.subr.mxu0 0.0
  %121 = vmatpush1.msra.mxu0 0.0
  %122 = vmatprep.subr.mxu0 0.0
  %123 = vmatpush1.msra.mxu0 0.0
  %124 = vmatprep.subr.mxu0 0.0
  %125 = vmatpush1.msra.mxu0 0.0
  %126 = vmatprep.subr.mxu0 0.0
  %127 = vmatpush1.msra.mxu0 0.0
  %128 = vmatprep.subr.mxu0 0.0
  %129 = vmatpush1.msra.mxu0 0.0
  %130 = vmatprep.subr.mxu0 0.0
  %131 = vmatpush1.msra.mxu0 0.0
  %132 = vmatprep.subr.mxu0 0.0
  %133 = vmatpush1.msra.mxu0 0.0
  %134 = vmatprep.subr.mxu0 0.0
  %135 = vmatpush1.msra.mxu0 0.0
  %136 = vmatprep.mubr.f32.mxu0 %v70
  %137 = vmatmul.mubr.f32.gmra.mrb[0].mxu0 %v14
  %v138 = vpop.f32.mrb[0].mxu0
  %v139 = vadd.f32 %v61, %v138
  %v140 = vpop.f32.mrb[0].mxu0
  %v141 = vadd.f32 %v65, %v140
  %142 = vdwg.mxu0
  %v143 = vmax.f32 %v139, 0.0
  %v144 = vmax.f32 %v141, 0.0
  %145 = vst [vmem:[%s3] sm:$0xff] %v143
  %146 = vst.msk [vmem:[%s3 + $0x8] sm:$0xff] %vm68, %v144
  // Predicated region
  $region14: #{parallel_layer_forward.1} parent=0 // pred_check
    _
  $region15: #{parallel_layer_forward.1} parent=0 // pred_check_branch
    %148 = sbr.rel (0) target = $region17
  $region16: #{parallel_layer_forward.1} parent=0 // pred_region
    _
  $region17: #{parallel_layer_forward.1} parent=0 // pred_fallthru
    _
  // Predicated region
  $region18: #{parallel_layer_forward.1} parent=0 // pred_check
    _
  $region19: #{parallel_layer_forward.1} parent=0 // pred_check_branch
    %150 = sbr.rel (0) target = $region21
  $region20: #{parallel_layer_forward.1} parent=0 // pred_region
    _
  $region21: #{parallel_layer_forward.1} parent=0 // pred_fallthru
    _

</llo_original>
